<compile_context>
chip_gen: v7x
topology: tpu7x:2x2x1
jax: 0.10.0
libtpu: 0.0.40
codegen_flags: <defaults>
</compile_context>

<pallas_src>
import functools
import math

import jax
import jax.numpy as jnp
from jax import lax
from jax.experimental import pallas as pl
from jax.experimental.pallas import tpu as pltpu


_VMEM_LIMIT_BYTES = 48 * 1024 * 1024  # safe on v5e/v6e (128 MiB) and v7x (64 MiB)


# ------------------------------ tile helpers --------------------------------


def _choose_tile(dim, preferred, align):
    """Largest tile <= preferred that divides `dim` and is `align`-aligned (else full dim)."""
    if dim <= preferred:
        return dim
    t = (preferred // align) * align
    while t >= align:
        if dim % t == 0:
            return t
        t -= align
    return dim


def _choose_head_group(num_heads, head_dim, dim):
    """Heads packed per attention grid step so the block lane width is >=128 (or == D)."""
    if dim <= 256:
        return num_heads
    for hg in range(1, num_heads + 1):
        if num_heads % hg == 0 and (hg * head_dim) % 128 == 0:
            return hg
    return num_heads


# ----------------------------- Pallas kernels ------------------------------


def _fused_linear_kernel(x_ref, w_ref, b_ref, o_ref, acc_ref):
    # x_ref: (tm, tk); w_ref: (G, tk, tn); b_ref: (G, 1, tn);
    # o_ref: (G, tm, tn); acc_ref: (G, tm, tn) f32 scratch.  Grid axis 3 = K reduction.
    @pl.when(pl.program_id(3) == 0)
    def _init():
        acc_ref[...] = jnp.zeros_like(acc_ref)

    x = x_ref[...]
    for g in range(w_ref.shape[0]):  # G is static and small (1 or 3)
        acc_ref[g] = acc_ref[g] + jnp.dot(
            x, w_ref[g], preferred_element_type=jnp.float32
        )

    @pl.when(pl.program_id(3) == pl.num_programs(3) - 1)
    def _finalize():
        o_ref[...] = (acc_ref[...] + b_ref[...].astype(jnp.float32)).astype(o_ref.dtype)


def _flash_attn_kernel(*refs, heads, head_dim, tq, tkv, has_mask, where_const):
    # Blocks: q (tq, heads*head_dim), k/v (tkv, heads*head_dim), optional mask
    # (1, tkv) or (tq, tkv), output (tq, heads*head_dim).
    # Scratch: m/l (heads, tq, 1) f32, acc (heads, tq, head_dim) f32.
    if has_mask:
        q_ref, k_ref, v_ref, m_ref, o_ref, m_scr, l_scr, acc_scr = refs
    else:
        q_ref, k_ref, v_ref, o_ref, m_scr, l_scr, acc_scr = refs
        m_ref = None

    kvi = pl.program_id(3)
    nkv = pl.num_programs(3)
    q_start = pl.program_id(2) * tq
    kv_start = kvi * tkv

    @pl.when(kvi == 0)
    def _init():
        m_scr[...] = jnp.full_like(m_scr, -jnp.inf)
        l_scr[...] = jnp.zeros_like(l_scr)
        acc_scr[...] = jnp.zeros_like(acc_scr)

    def _accumulate(apply_causal):
        # q/k/v kept in their native dtype; only the accumulators are f32.
        q = q_ref[...]
        k = k_ref[...]
        v = v_ref[...]

        if apply_causal:
            row = q_start + lax.broadcasted_iota(jnp.int32, (tq, tkv), 0)
            col = kv_start + lax.broadcasted_iota(jnp.int32, (tq, tkv), 1)
            keep = row >= col
        if has_mask:
            add_mask = m_ref[...].astype(jnp.float32)  # (1, tkv) or (tq, tkv)

        for g in range(heads):
            sl = slice(g * head_dim, (g + 1) * head_dim)
            # scores for head g: q_g @ k_g^T  (1/sqrt(head_size) already folded into q)
            s = lax.dot_general(
                q[:, sl], k[:, sl], (((1,), (1,)), ((), ())),
                preferred_element_type=jnp.float32,
            )  # (tq, tkv)
            if apply_causal:
                s = jnp.where(keep, s, where_const)
            if has_mask:
                s = s + add_mask

            m_prev = m_scr[g]                                       # (tq, 1)
            m_new = jnp.maximum(m_prev, jnp.max(s, axis=-1, keepdims=True))
            alpha = jnp.exp(m_prev - m_new)
            p = jnp.exp(s - m_new)
            l_scr[g] = alpha * l_scr[g] + jnp.sum(p, axis=-1, keepdims=True)
            acc_scr[g] = alpha * acc_scr[g] + jnp.dot(
                p.astype(v.dtype), v[:, sl], preferred_element_type=jnp.float32
            )
            m_scr[g] = m_new

    q_last = q_start + tq - 1
    kv_last = kv_start + tkv - 1

    # Diagonal band: needs the causal select.
    @pl.when((kv_start <= q_last) & (kv_last > q_start))
    def _diag():
        _accumulate(apply_causal=True)

    # Strictly below the diagonal: fully visible, skip the iota/select.
    @pl.when(kv_last <= q_start)
    def _below():
        _accumulate(apply_causal=False)

    # kv tiles strictly above the diagonal are skipped entirely (their softmax weight
    # underflows to zero in the reference -10000 masking scheme).

    @pl.when(kvi == nkv - 1)
    def _finalize():
        for g in range(heads):
            inv_l = pl.reciprocal(l_scr[g], approx=True)  # EUP slot, ~free
            o_ref[:, g * head_dim:(g + 1) * head_dim] = (
                acc_scr[g] * inv_l
            ).astype(o_ref.dtype)


# ------------------------------ Python wrappers -----------------------------


def fused_linear_pallas(x, w, b):
    """x: [B, S, Din]; w: [G, Din, Dout]; b: [G, 1, Dout] -> [G, B, S, Dout] = x @ w[g] + b[g]."""
    B, S, Din = x.shape
    G, _, Dout = w.shape
    tm = _choose_tile(S, 256, 8)
    tn = _choose_tile(Dout, 256, 128)
    tk = _choose_tile(Din, 512, 128)
    return pl.pallas_call(
        _fused_linear_kernel,
        out_shape=jax.ShapeDtypeStruct((G, B, S, Dout), x.dtype),
        grid=(B, S // tm, Dout // tn, Din // tk),
        in_specs=[
            pl.BlockSpec((None, tm, tk), lambda b_, m, n, k: (b_, m, k)),
            pl.BlockSpec((G, tk, tn), lambda b_, m, n, k: (0, k, n)),
            pl.BlockSpec((G, 1, tn), lambda b_, m, n, k: (0, 0, n)),
        ],
        out_specs=pl.BlockSpec((G, None, tm, tn), lambda b_, m, n, k: (0, b_, m, n)),
        scratch_shapes=[pltpu.VMEM((G, tm, tn), jnp.float32)],
        compiler_params=pltpu.CompilerParams(
            dimension_semantics=("parallel", "parallel", "parallel", "arbitrary"),
            vmem_limit_bytes=_VMEM_LIMIT_BYTES,
        ),
    )(x, w, b)


def _prepare_mask(attention_mask, B, S):
    """Normalize the additive attention mask without materializing a dense SxS tensor."""
    if attention_mask is None:
        return None, None
    m = jnp.asarray(attention_mask)
    if m.ndim < 2 or m.shape[-2] == 1:
        # key-only (padding) mask: stream a single row per batch.
        return jnp.broadcast_to(m, (B, 1, 1, S)).reshape(B, 1, S), "key"
    return jnp.broadcast_to(m, (B, 1, S, S)).reshape(B, S, S), "full"


def flash_attention_pallas(qkv, attention_mask, num_heads, *, where_const=-10000.0):
    """qkv: [3, B, S, D] (head-major last dim, q already scaled) -> context [B, S, D]."""
    _, B, S, D = qkv.shape
    H = num_heads
    Dh = D // H
    hg = _choose_head_group(H, Dh, D)  # heads packed per grid step
    dh_blk = hg * Dh                   # lane width of q/k/v/out blocks
    tq = _choose_tile(S, 128, 8)
    tkv = _choose_tile(S, 128, 128)

    mask, mask_kind = _prepare_mask(attention_mask, B, S)
    has_mask = mask is not None

    kernel = functools.partial(
        _flash_attn_kernel,
        heads=hg,
        head_dim=Dh,
        tq=tq,
        tkv=tkv,
        has_mask=has_mask,
        where_const=where_const,
    )

    q_spec = pl.BlockSpec((None, None, tq, dh_blk), lambda b, h, qi, ki: (0, b, qi, h))
    k_spec = pl.BlockSpec((None, None, tkv, dh_blk), lambda b, h, qi, ki: (1, b, ki, h))
    v_spec = pl.BlockSpec((None, None, tkv, dh_blk), lambda b, h, qi, ki: (2, b, ki, h))
    in_specs = [q_spec, k_spec, v_spec]
    args = [qkv, qkv, qkv]
    if has_mask:
        if mask_kind == "key":
            in_specs.append(
                pl.BlockSpec((None, 1, tkv), lambda b, h, qi, ki: (b, 0, ki))
            )
        else:
            in_specs.append(
                pl.BlockSpec((None, tq, tkv), lambda b, h, qi, ki: (b, qi, ki))
            )
        args.append(mask)

    return pl.pallas_call(
        kernel,
        out_shape=jax.ShapeDtypeStruct((B, S, D), qkv.dtype),
        grid=(B, H // hg, S // tq, S // tkv),
        in_specs=in_specs,
        out_specs=pl.BlockSpec((None, tq, dh_blk), lambda b, h, qi, ki: (b, qi, h)),
        scratch_shapes=[
            pltpu.VMEM((hg, tq, 1), jnp.float32),   # running max
            pltpu.VMEM((hg, tq, 1), jnp.float32),   # running sum
            pltpu.VMEM((hg, tq, Dh), jnp.float32),  # output accumulator
        ],
        compiler_params=pltpu.CompilerParams(
            dimension_semantics=("parallel", "parallel", "parallel", "arbitrary"),
            vmem_limit_bytes=_VMEM_LIMIT_BYTES,
        ),
    )(*args)


def atp_self_attention_forward(x, params, num_heads, attention_mask=None):
    """x: [B, S, D] -> [B, S, D]. Mirrors ATPSelfAttention.forward (eval mode)."""
    B, S, D = x.shape
    H = num_heads
    Dh = D // H

    # Re-pack the QKV projection (weight-sized op only): [D, 3D] with column layout
    # (head, {q,k,v}, d) -> [3, D, D] stacked q|k|v, head-major output columns, with
    # the 1/sqrt(head_size) attention scale folded into the q projection.
    w_stack = params["w_qkv"].reshape(D, H, 3, Dh).transpose(2, 0, 1, 3).reshape(3, D, D)
    b_stack = params["b_qkv"].reshape(H, 3, Dh).transpose(1, 0, 2).reshape(3, 1, D)
    scale = jnp.array(
        [1.0 / math.sqrt(Dh), 1.0, 1.0], dtype=w_stack.dtype
    ).reshape(3, 1, 1)
    w_stack = w_stack * scale
    b_stack = b_stack * scale

    # Fused q/k/v projection -> [3, B, S, D] (head-major last dim); no HBM transposes.
    qkv = fused_linear_pallas(x, w_stack, b_stack)

    # Flash attention (causal + additive mask + online softmax) -> [B, S, D].
    # attention_dropout is identity in eval mode.
    ctx = flash_attention_pallas(qkv, attention_mask, num_heads=H)

    # Dense output projection; final dropout is identity in eval mode.
    out = fused_linear_pallas(
        ctx, params["w_dense"].reshape(1, D, D), params["b_dense"].reshape(1, 1, D)
    )
    return out.reshape(B, S, D)


# ------------------------------- reference ----------------------------------


def _reference_forward(x, params, num_heads, attention_mask=None):
    B, S, D = x.shape
    Dh = D // num_heads
    qkv = jnp.einsum("bsd,de->bse", x, params["w_qkv"]) + params["b_qkv"]
    qkv = qkv.reshape(B, S, num_heads, 3 * Dh).transpose(0, 2, 1, 3)
    q, k, v = jnp.split(qkv, 3, axis=-1)
    s = jnp.einsum("bhqd,bhkd->bhqk", q, k) / math.sqrt(Dh)
    causal = jnp.tril(jnp.ones((S, S), dtype=bool))[None, None]
    s = jnp.where(causal, s, -10000.0)
    if attention_mask is not None:
        s = s + attention_mask
    p = jax.nn.softmax(s, axis=-1)
    ctx = jnp.einsum("bhqk,bhkd->bhqd", p, v)
    ctx = ctx.transpose(0, 2, 1, 3).reshape(B, S, D)
    return jnp.einsum("bsd,de->bse", ctx, params["w_dense"]) + params["b_dense"]


# --------------------------------- main --------------------------------------


if __name__ == "__main__":
    B, S, D, H = 2, 8, 32, 4  # batch, seq, dim, num_heads (head_size = 8)

    key = jax.random.PRNGKey(0)
    kx, kw1, kb1, kw2, kb2, km = jax.random.split(key, 6)

    x = jax.random.normal(kx, (B, S, D), dtype=jnp.float32)

    bound1 = 1.0 / math.sqrt(D)
    params = {
        "w_qkv": jax.random.uniform(kw1, (D, 3 * D), jnp.float32, -bound1, bound1),
        "b_qkv": jax.random.uniform(kb1, (3 * D,), jnp.float32, -bound1, bound1),
        "w_dense": jax.random.uniform(kw2, (D, D), jnp.float32, -bound1, bound1),
        "b_dense": jax.random.uniform(kb2, (D,), jnp.float32, -bound1, bound1),
    }

    # additive key/padding mask, broadcastable to [B, 1, S, S] (kept as a row -> no
    # dense SxS mask is ever materialized or DMA'd).
    attention_mask = jnp.where(
        jax.random.uniform(km, (B, 1, 1, S)) > 0.2, 0.0, -10000.0
    ).astype(jnp.float32)

    # masked path
    out = atp_self_attention_forward(x, params, H, attention_mask)
    out = jax.block_until_ready(out)
    ref = _reference_forward(x, params, H, attention_mask)
    assert out.shape == (B, S, D)
    # approx=True softmax reciprocal -> slightly relaxed tolerance
    assert jnp.allclose(out, ref, atol=5e-3, rtol=5e-3), "mismatch vs. reference (masked)"

    # no-mask path (separately compiled kernel variant, no zero-mask DMA)
    out_nm = atp_self_attention_forward(x, params, H, None)
    out_nm = jax.block_until_ready(out_nm)
    ref_nm = _reference_forward(x, params, H, None)
    assert jnp.allclose(out_nm, ref_nm, atol=5e-3, rtol=5e-3), "mismatch vs. reference (no mask)"

    print("KERNEL_OK")
</pallas_src>

<mosaic_0001>
module attributes {stable_mosaic.version = 11 : i64} {
  func.func @_fused_linear_kernel(%arg0: i32, %arg1: i32, %arg2: i32, %arg3: i32, %arg4: memref<1x8x32xf32, #tpu.memory_space<vmem>>, %arg5: memref<3x32x32xf32, #tpu.memory_space<vmem>>, %arg6: memref<3x1x32xf32, #tpu.memory_space<vmem>>, %arg7: memref<3x1x8x32xf32, #tpu.memory_space<vmem>>, %arg8: memref<3x8x32xf32, #tpu.memory_space<vmem>>) attributes {dimension_semantics = [#tpu.dimension_semantics<parallel>, #tpu.dimension_semantics<parallel>, #tpu.dimension_semantics<parallel>, #tpu.dimension_semantics<arbitrary>], iteration_bounds = array<i64: 2, 1, 1, 1>, scalar_prefetch = 0 : i64, scratch_operands = 1 : i64, tpu.core_type = #tpu.core_type<tc>, window_params = [{transform_indices = @transform_0, window_bounds = array<i64: 1, 8, 32>}, {transform_indices = @transform_1, window_bounds = array<i64: 3, 32, 32>}, {transform_indices = @transform_2, window_bounds = array<i64: 3, 1, 32>}, {transform_indices = @transform_3, window_bounds = array<i64: 3, 1, 8, 32>}]} {
    %c0_i32 = arith.constant 0 : i32
    %0 = arith.cmpi eq, %arg3, %c0_i32 : i32
    %1 = arith.extui %0 : i1 to i32
    %c0_i32_0 = arith.constant 0 : i32
    %2 = arith.cmpi ne, %1, %c0_i32_0 : i32
    scf.if %2 {
      %cst_32 = arith.constant 0.000000e+00 : f32
      %35 = vector.broadcast %cst_32 : f32 to vector<3x8x32xf32>
      %c0_33 = arith.constant 0 : index
      %c0_34 = arith.constant 0 : index
      %c0_35 = arith.constant 0 : index
      %36 = vector.load %arg8[%c0_33, %c0_34, %c0_35] : memref<3x8x32xf32, #tpu.memory_space<vmem>>, vector<3x8x32xf32>
      tpu.vector_store %arg8[%c0_33, %c0_34, %c0_35], %35 {strides = array<i32>} : memref<3x8x32xf32, #tpu.memory_space<vmem>>, vector<3x8x32xf32>,
    } else {
    }
    %c0 = arith.constant 0 : index
    %c0_1 = arith.constant 0 : index
    %c0_2 = arith.constant 0 : index
    %3 = vector.load %arg4[%c0, %c0_1, %c0_2] : memref<1x8x32xf32, #tpu.memory_space<vmem>>, vector<1x8x32xf32>
    %4 = vector.shape_cast %3 : vector<1x8x32xf32> to vector<8x32xf32>
    %c0_3 = arith.constant 0 : index
    %c0_4 = arith.constant 0 : index
    %c0_5 = arith.constant 0 : index
    %5 = vector.load %arg8[%c0_3, %c0_4, %c0_5] : memref<3x8x32xf32, #tpu.memory_space<vmem>>, vector<1x8x32xf32>
    %6 = vector.shape_cast %5 : vector<1x8x32xf32> to vector<8x32xf32>
    %c0_6 = arith.constant 0 : index
    %c0_7 = arith.constant 0 : index
    %c0_8 = arith.constant 0 : index
    %7 = vector.load %arg5[%c0_6, %c0_7, %c0_8] : memref<3x32x32xf32, #tpu.memory_space<vmem>>, vector<1x32x32xf32>
    %8 = vector.shape_cast %7 : vector<1x32x32xf32> to vector<32x32xf32>
    %cst = arith.constant dense<0.000000e+00> : vector<8x32xf32>
    %9 = tpu.matmul %4, %8, %cst {dimension_numbers = #tpu.dot_dimension_numbers<[1], [0], [0], [1], [0, 0, 1, 1], [], []>} : vector<8x32xf32>, vector<32x32xf32>, vector<8x32xf32> -> vector<8x32xf32>
    %10 = arith.addf %6, %9 : vector<8x32xf32>
    %c0_9 = arith.constant 0 : index
    %c0_10 = arith.constant 0 : index
    %c0_11 = arith.constant 0 : index
    %11 = vector.load %arg8[%c0_9, %c0_10, %c0_11] : memref<3x8x32xf32, #tpu.memory_space<vmem>>, vector<1x8x32xf32>
    %12 = vector.shape_cast %11 : vector<1x8x32xf32> to vector<8x32xf32>
    %13 = vector.shape_cast %10 : vector<8x32xf32> to vector<1x8x32xf32>
    tpu.vector_store %arg8[%c0_9, %c0_10, %c0_11], %13 {strides = array<i32>} : memref<3x8x32xf32, #tpu.memory_space<vmem>>, vector<1x8x32xf32>,
    %c1 = arith.constant 1 : index
    %c0_12 = arith.constant 0 : index
    %c0_13 = arith.constant 0 : index
    %14 = vector.load %arg8[%c1, %c0_12, %c0_13] : memref<3x8x32xf32, #tpu.memory_space<vmem>>, vector<1x8x32xf32>
    %15 = vector.shape_cast %14 : vector<1x8x32xf32> to vector<8x32xf32>
    %c1_14 = arith.constant 1 : index
    %c0_15 = arith.constant 0 : index
    %c0_16 = arith.constant 0 : index
    %16 = vector.load %arg5[%c1_14, %c0_15, %c0_16] : memref<3x32x32xf32, #tpu.memory_space<vmem>>, vector<1x32x32xf32>
    %17 = vector.shape_cast %16 : vector<1x32x32xf32> to vector<32x32xf32>
    %cst_17 = arith.constant dense<0.000000e+00> : vector<8x32xf32>
    %18 = tpu.matmul %4, %17, %cst_17 {dimension_numbers = #tpu.dot_dimension_numbers<[1], [0], [0], [1], [0, 0, 1, 1], [], []>} : vector<8x32xf32>, vector<32x32xf32>, vector<8x32xf32> -> vector<8x32xf32>
    %19 = arith.addf %15, %18 : vector<8x32xf32>
    %c1_18 = arith.constant 1 : index
    %c0_19 = arith.constant 0 : index
    %c0_20 = arith.constant 0 : index
    %20 = vector.load %arg8[%c1_18, %c0_19, %c0_20] : memref<3x8x32xf32, #tpu.memory_space<vmem>>, vector<1x8x32xf32>
    %21 = vector.shape_cast %20 : vector<1x8x32xf32> to vector<8x32xf32>
    %22 = vector.shape_cast %19 : vector<8x32xf32> to vector<1x8x32xf32>
    tpu.vector_store %arg8[%c1_18, %c0_19, %c0_20], %22 {strides = array<i32>} : memref<3x8x32xf32, #tpu.memory_space<vmem>>, vector<1x8x32xf32>,
    %c2 = arith.constant 2 : index
    %c0_21 = arith.constant 0 : index
    %c0_22 = arith.constant 0 : index
    %23 = vector.load %arg8[%c2, %c0_21, %c0_22] : memref<3x8x32xf32, #tpu.memory_space<vmem>>, vector<1x8x32xf32>
    %24 = vector.shape_cast %23 : vector<1x8x32xf32> to vector<8x32xf32>
    %c2_23 = arith.constant 2 : index
    %c0_24 = arith.constant 0 : index
    %c0_25 = arith.constant 0 : index
    %25 = vector.load %arg5[%c2_23, %c0_24, %c0_25] : memref<3x32x32xf32, #tpu.memory_space<vmem>>, vector<1x32x32xf32>
    %26 = vector.shape_cast %25 : vector<1x32x32xf32> to vector<32x32xf32>
    %cst_26 = arith.constant dense<0.000000e+00> : vector<8x32xf32>
    %27 = tpu.matmul %4, %26, %cst_26 {dimension_numbers = #tpu.dot_dimension_numbers<[1], [0], [0], [1], [0, 0, 1, 1], [], []>} : vector<8x32xf32>, vector<32x32xf32>, vector<8x32xf32> -> vector<8x32xf32>
    %28 = arith.addf %24, %27 : vector<8x32xf32>
    %c2_27 = arith.constant 2 : index
    %c0_28 = arith.constant 0 : index
    %c0_29 = arith.constant 0 : index
    %29 = vector.load %arg8[%c2_27, %c0_28, %c0_29] : memref<3x8x32xf32, #tpu.memory_space<vmem>>, vector<1x8x32xf32>
    %30 = vector.shape_cast %29 : vector<1x8x32xf32> to vector<8x32xf32>
    %31 = vector.shape_cast %28 : vector<8x32xf32> to vector<1x8x32xf32>
    tpu.vector_store %arg8[%c2_27, %c0_28, %c0_29], %31 {strides = array<i32>} : memref<3x8x32xf32, #tpu.memory_space<vmem>>, vector<1x8x32xf32>,
    %c0_i32_30 = arith.constant 0 : i32
    %32 = arith.cmpi eq, %arg3, %c0_i32_30 : i32
    %33 = arith.extui %32 : i1 to i32
    %c0_i32_31 = arith.constant 0 : i32
    %34 = arith.cmpi ne, %33, %c0_i32_31 : i32
    scf.if %34 {
      %c0_32 = arith.constant 0 : index
      %c0_33 = arith.constant 0 : index
      %c0_34 = arith.constant 0 : index
      %35 = vector.load %arg8[%c0_32, %c0_33, %c0_34] : memref<3x8x32xf32, #tpu.memory_space<vmem>>, vector<3x8x32xf32>
      %c0_35 = arith.constant 0 : index
      %c0_36 = arith.constant 0 : index
      %c0_37 = arith.constant 0 : index
      %36 = vector.load %arg6[%c0_35, %c0_36, %c0_37] : memref<3x1x32xf32, #tpu.memory_space<vmem>>, vector<3x1x32xf32>
      %37 = vector.broadcast %36 : vector<3x1x32xf32> to vector<3x8x32xf32>
      %38 = arith.addf %35, %37 : vector<3x8x32xf32>
      %c0_38 = arith.constant 0 : index
      %c0_39 = arith.constant 0 : index
      %c0_40 = arith.constant 0 : index
      %c0_41 = arith.constant 0 : index
      %39 = vector.load %arg7[%c0_38, %c0_39, %c0_40, %c0_41] : memref<3x1x8x32xf32, #tpu.memory_space<vmem>>, vector<3x1x8x32xf32>
      %40 = vector.shape_cast %39 : vector<3x1x8x32xf32> to vector<3x8x32xf32>
      %41 = vector.shape_cast %38 : vector<3x8x32xf32> to vector<3x1x8x32xf32>
      tpu.vector_store %arg7[%c0_38, %c0_39, %c0_40, %c0_41], %41 {strides = array<i32>} : memref<3x1x8x32xf32, #tpu.memory_space<vmem>>, vector<3x1x8x32xf32>,
    } else {
    }
    return
  }
  func.func @transform_0(%arg0: i32, %arg1: i32, %arg2: i32, %arg3: i32) -> (i32, i32, i32) {
    %c0_i32 = arith.constant 0 : i32
    return %arg0, %arg1, %arg3 : i32, i32, i32
  }
  func.func @transform_1(%arg0: i32, %arg1: i32, %arg2: i32, %arg3: i32) -> (i32, i32, i32) {
    %c0_i32 = arith.constant 0 : i32
    %c0_i32_0 = arith.constant 0 : i32
    return %c0_i32, %arg3, %arg2 : i32, i32, i32
  }
  func.func @transform_2(%arg0: i32, %arg1: i32, %arg2: i32, %arg3: i32) -> (i32, i32, i32) {
    %c0_i32 = arith.constant 0 : i32
    %c0_i32_0 = arith.constant 0 : i32
    %c0_i32_1 = arith.constant 0 : i32
    return %c0_i32, %c0_i32_0, %arg2 : i32, i32, i32
  }
  func.func @transform_3(%arg0: i32, %arg1: i32, %arg2: i32, %arg3: i32) -> (i32, i32, i32, i32) {
    %c0_i32 = arith.constant 0 : i32
    %c0_i32_0 = arith.constant 0 : i32
    return %c0_i32, %arg0, %arg1, %arg2 : i32, i32, i32, i32
  }
}

</mosaic_0001>

<llo_original>
// kernel: tpu_custom_call.1
$region0: #{tpu_custom_call.1}
  #allocation0 [shape = 'u32[]', space=smem, size = 0x4, offset = 0x4, fixed_abs, tag = 'smem constant byte address 0x4 - core index']
  #allocation1 [shape = 'u32[144,128]{1,0:T(1,128)}', space=vmem, size = 0x12000, scoped, tag = 'internal scratch']
  #allocation2 [shape = 'f32[3,8,32]{2,1,0:T(8,128)}', space=vmem, size = 0x3000, scoped, tag = 'scratch operand']
  %s0 = inlined_call_operand.hbm [shape: f32[2,8,32], index: 0, kind: input, shape index: {}]
  %s1 = inlined_call_operand.hbm [shape: f32[3,32,32], index: 1, kind: input, shape index: {}]
  %s2 = inlined_call_operand.vmem [shape: f32[3,1,32], index: 2, kind: input, shape index: {}]
  %s3 = inlined_call_operand.hbm [shape: f32[3,2,8,32], index: 3, kind: output, shape index: {}]
  %s4 = sld [smem:[#allocation0]]
  $region61: #{tpu_custom_call.1} parent=0
    _
  %s6 = ssub.s32 1, %s4
  %s7 = scalar_select 0, %s6, %s4
  $region1: #{tpu_custom_call.1} parent=0
    #allocation3 [shape = 'u8[8192]{0}', space=vmem, size = 0x2000, scoped, tag = 'input window, operand 0']
    #allocation4 [shape = 's32[2]{0}', space=sflag, size = 0x8, scoped, tag = 'scoped memory for tpu_custom_call.1']
    #allocation5 [shape = 's32[2]{0}', space=sflag, size = 0x8, scoped, tag = 'scoped memory for tpu_custom_call.1']
    #allocation6 [shape = 'u8[49152]{0}', space=vmem, size = 0xc000, scoped, tag = 'input window, operand 1, single buffered']
    #allocation7 [shape = 's32[1]{0}', space=sflag, size = 0x4, scoped, tag = 'scoped memory for tpu_custom_call.1']
    #allocation8 [shape = 'u8[24576]{0}', space=vmem, size = 0x6000, scoped, tag = 'output window, operand 0']
    %8 = vsyncpa [#allocation4], 0
    %s9 = scalar_lea.sflag [#allocation4], 1
    %10 = vsyncpa %s9, 0
    %11 = vsyncpa [#allocation7], 0
    %12 = vsyncpa [#allocation5], 0
    %s13 = scalar_lea.sflag [#allocation5], 1
    %14 = vsyncpa %s13, 0
    loop: start=0, step=1, limit=4
    $region2: #{tpu_custom_call.1} parent=1 // loop_pre_header
      _
    $region3: #{tpu_custom_call.1} parent=1 // loop_header
      %s16 = sphi 0, %s20
      %p17 = scmp.ge.s32.totalorder %s16, 4
      %s23 = sphi 0, %s49
      %s24 = sphi 0, %s45
      %s25 = sphi 0, %s41
      %s26 = sphi 0, %s37
      %s27 = sphi 0, %s23
      %s28 = sphi 0, %s24
      %s29 = sphi 0, %s25
      %s30 = sphi 0, %s26
      %s31 = sphi 0, %s27
      %s32 = sphi 0, %s28
      %s33 = sphi 0, %s29
      %s34 = sphi 0, %s30
      %s56 = sphi 0, %s58
      %s59 = sphi 0, %s56
      %s60 = sphi 0, %s59
      %s76 = sphi 0, %s60
      %s84 = sphi 0, %s86
      %s87 = sphi 0, %s84
      %s88 = sphi 0, %s87
      %s104 = sphi 0, %s88
      %s110 = sphi 0, %s112
      %s113 = sphi 0, %s110
      %s114 = sphi 0, %s113
      %s130 = sphi 0, %s114
      %s140 = sphi 0, %s142
      %s143 = sphi 0, %s140
      %s144 = sphi 0, %s143
      %s160 = sphi 0, %s144
    $region4: #{tpu_custom_call.1} parent=1 // loop_header_branch
      %19 = sbr.rel (%p17) target = $region8
    $region5: #{tpu_custom_call.1} parent=1 // loop_body
      %s21 = ssub.s32 %s16, 1
      %s22 = ssub.s32 %s16, 2
      %s35 = sadd.s32 1, %s26
      %p36 = scmp.ge.s32.totalorder %s35, 1
      %s37 = scalar_select %p36, 0, %s35
      %s38 = sadd.s32 1, %s25
      %s39 = scalar_select %p36, %s38, %s25
      %p40 = scmp.ge.s32.totalorder %s39, 1
      %s41 = scalar_select %p40, 0, %s39
      %s42 = sadd.s32 1, %s24
      %s43 = scalar_select %p40, %s42, %s24
      %p44 = scmp.ge.s32.totalorder %s43, 1
      %s45 = scalar_select %p44, 0, %s43
      %s46 = sadd.s32 1, %s23
      %s47 = scalar_select %p44, %s46, %s23
      %p48 = scmp.ge.s32.totalorder %s47, 2
      %s49 = scalar_select %p48, 0, %s47
      %s50 = ssub.s32 %s23, %s49
      %s51 = ssub.s32 %s24, %s45
      %s52 = sor.u32 %s50, %s51
      %s53 = ssub.s32 %s26, %s37
      %s54 = sor.u32 %s52, %s53
      %p55 = scmp.eq.s32.totalorder %s54, 0
      %s57 = sadd.s32 %s56, 1
      %s58 = scalar_select %p55, %s56, %s57
      %p61 = pneg %p55
      %p62 = scmp.eq.s32.totalorder %s16, 1
      %p63 = por %p61, %p62
      %p64 = scmp.ne.s32.totalorder %s56, %s59
      %p65 = scmp.eq.s32.totalorder %s16, 0
      %p66 = por %p64, %p65
      %p67 = scmp.ne.s32.totalorder %s56, %s59
      %p68 = scmp.eq.s32.totalorder %s21, 1
      %p69 = por %p67, %p68
      %p70 = scmp.ne.s32.totalorder %s59, %s60
      %p71 = scmp.eq.s32.totalorder %s21, 0
      %p72 = por %p70, %p71
      %p73 = scmp.ne.s32.totalorder %s59, %s60
      %p74 = scmp.eq.s32.totalorder %s22, 1
      %p75 = por %p73, %p74
      %p77 = scmp.ne.s32.totalorder %s60, %s76
      %p78 = scmp.eq.s32.totalorder %s22, 0
      %p79 = por %p77, %p78
      %s80 = ssub.s32 %s26, %s37
      %s81 = ssub.s32 %s25, %s41
      %s82 = sor.u32 %s80, %s81
      %p83 = scmp.eq.s32.totalorder %s82, 0
      %s85 = sadd.s32 %s84, 1
      %s86 = scalar_select %p83, %s84, %s85
      %p89 = pneg %p83
      %p90 = scmp.eq.s32.totalorder %s16, 1
      %p91 = por %p89, %p90
      %p92 = scmp.ne.s32.totalorder %s84, %s87
      %p93 = scmp.eq.s32.totalorder %s16, 0
      %p94 = por %p92, %p93
      %p95 = scmp.ne.s32.totalorder %s84, %s87
      %p96 = scmp.eq.s32.totalorder %s21, 1
      %p97 = por %p95, %p96
      %p98 = scmp.ne.s32.totalorder %s87, %s88
      %p99 = scmp.eq.s32.totalorder %s21, 0
      %p100 = por %p98, %p99
      %p101 = scmp.ne.s32.totalorder %s87, %s88
      %p102 = scmp.eq.s32.totalorder %s22, 1
      %p103 = por %p101, %p102
      %p105 = scmp.ne.s32.totalorder %s88, %s104
      %p106 = scmp.eq.s32.totalorder %s22, 0
      %p107 = por %p105, %p106
      %s108 = ssub.s32 %s25, %s41
      %p109 = scmp.eq.s32.totalorder %s108, 0
      %s111 = sadd.s32 %s110, 1
      %s112 = scalar_select %p109, %s110, %s111
      %p115 = pneg %p109
      %p116 = scmp.eq.s32.totalorder %s16, 1
      %p117 = por %p115, %p116
      %p118 = scmp.ne.s32.totalorder %s110, %s113
      %p119 = scmp.eq.s32.totalorder %s16, 0
      %p120 = por %p118, %p119
      %p121 = scmp.ne.s32.totalorder %s110, %s113
      %p122 = scmp.eq.s32.totalorder %s21, 1
      %p123 = por %p121, %p122
      %p124 = scmp.ne.s32.totalorder %s113, %s114
      %p125 = scmp.eq.s32.totalorder %s21, 0
      %p126 = por %p124, %p125
      %p127 = scmp.ne.s32.totalorder %s113, %s114
      %p128 = scmp.eq.s32.totalorder %s22, 1
      %p129 = por %p127, %p128
      %p131 = scmp.ne.s32.totalorder %s114, %s130
      %p132 = scmp.eq.s32.totalorder %s22, 0
      %p133 = por %p131, %p132
      %s134 = ssub.s32 %s23, %s49
      %s135 = ssub.s32 %s24, %s45
      %s136 = sor.u32 %s134, %s135
      %s137 = ssub.s32 %s25, %s41
      %s138 = sor.u32 %s136, %s137
      %p139 = scmp.eq.s32.totalorder %s138, 0
      %s141 = sadd.s32 %s140, 1
      %s142 = scalar_select %p139, %s140, %s141
      %p145 = pneg %p139
      %p146 = scmp.eq.s32.totalorder %s16, 1
      %p147 = por %p145, %p146
      %p148 = scmp.ne.s32.totalorder %s140, %s143
      %p149 = scmp.eq.s32.totalorder %s16, 0
      %p150 = por %p148, %p149
      %p151 = scmp.ne.s32.totalorder %s140, %s143
      %p152 = scmp.eq.s32.totalorder %s21, 1
      %p153 = por %p151, %p152
      %p154 = scmp.ne.s32.totalorder %s143, %s144
      %p155 = scmp.eq.s32.totalorder %s21, 0
      %p156 = por %p154, %p155
      %p157 = scmp.ne.s32.totalorder %s143, %s144
      %p158 = scmp.eq.s32.totalorder %s22, 1
      %p159 = por %p157, %p158
      %p161 = scmp.ne.s32.totalorder %s144, %s160
      %p162 = scmp.eq.s32.totalorder %s22, 0
      %p163 = por %p161, %p162
      %p164 = scmp.le.s32.totalorder 1, %s16
      %p165 = scmp.lt.s32.totalorder %s16, 3
      %p166 = pnand %p164, %p165
      %p167 = pneg %p166
      // Predicated region
      $region9: #{tpu_custom_call.1} parent=5 // pred_check
        _
      $region10: #{tpu_custom_call.1} parent=5 // pred_check_branch
        %169 = sbr.rel (%p166) target = $region12
      $region11: #{tpu_custom_call.1} parent=5 // pred_region
        %s170 = ssub.s32 %s16, 1
        // Predicated region
        $region13: #{tpu_custom_call.1} parent=11 // pred_check
          %p171 = pneg %p100
        $region14: #{tpu_custom_call.1} parent=11 // pred_check_branch
          %173 = sbr.rel (%p171) target = $region16
        $region15: #{tpu_custom_call.1} parent=11 // pred_region
          %s174 = smul.u32 4, %s30
          %s176 = ssub.s32 1536, 1536
          %177 = vsyncadd [#allocation7], %s176
          %s178 = sadd.s32 %s29, %s174
          %s179 = smul.addr %s178, 128
          %s180 = scalar_lea.hbm %s1, %s179
          %s181 = sshll.u32 [#allocation6], 4
          %s182 = int_to_ptr.vmem [resolvable:$true] %s181
          %187 = dma.hbm_to_vmem [thread:$0]  %s180, 1536, %s182, [#allocation7], 128, 128, 8
        $region16: #{tpu_custom_call.1} parent=11 // pred_fallthru
          _
        // Predicated region
        $region17: #{tpu_custom_call.1} parent=11 // pred_check
          %p188 = pneg %p126
        $region18: #{tpu_custom_call.1} parent=11 // pred_check_branch
          %190 = sbr.rel (%p188) target = $region20
        $region19: #{tpu_custom_call.1} parent=11 // pred_region
          %p191 = scmp.lt.s32.totalorder %s29, 0
          %s192 = scalar_select %p191, %s29, 0
          %s193 = scalar_lea.vmem %s2, %s192
        $region20: #{tpu_custom_call.1} parent=11 // pred_fallthru
          _
      $region12: #{tpu_custom_call.1} parent=5 // pred_fallthru
        _
      %p194 = scmp.lt.s32.totalorder %s16, 2
      // Predicated region
      $region21: #{tpu_custom_call.1} parent=5 // pred_check
        %p195 = pneg %p194
      $region22: #{tpu_custom_call.1} parent=5 // pred_check_branch
        %197 = sbr.rel (%p195) target = $region24
      $region23: #{tpu_custom_call.1} parent=5 // pred_region
        // Predicated region
        $region25: #{tpu_custom_call.1} parent=23 // pred_check
          %p198 = pneg %p66
        $region26: #{tpu_custom_call.1} parent=23 // pred_check_branch
          %200 = sbr.rel (%p198) target = $region28
        $region27: #{tpu_custom_call.1} parent=23 // pred_region
          %s201 = sand.u32 %s56, 1
          %s202 = scalar_lea.sflag [#allocation4], %s201
          %s203 = sand.u32 %s56, 1
          %s204 = smul.addr %s203, 8
          %s205 = scalar_lea.vmem [#allocation3], %s204
          %s207 = ssub.s32 128, 128
          %208 = vsyncadd %s202, %s207
          %s209 = sadd.s32 %s26, %s24
          %s210 = sadd.s32 %s209, %s23
          %s211 = smul.addr %s210, 128
          %s212 = scalar_lea.hbm %s0, %s211
          %s214 = sshll.u32 %s205, 4
          %s215 = int_to_ptr.vmem [resolvable:$true] %s214
          %217 = dma.hbm_to_vmem [thread:$0]  %s212, 128, %s215, %s202
        $region28: #{tpu_custom_call.1} parent=23 // pred_fallthru
          _
      $region24: #{tpu_custom_call.1} parent=5 // pred_fallthru
        _
      %p218 = scmp.le.s32.totalorder 1, %s16
      %p219 = scmp.lt.s32.totalorder %s16, 3
      %p220 = pnand %p218, %p219
      %p221 = pneg %p220
      // Predicated region
      $region29: #{tpu_custom_call.1} parent=5 // pred_check
        _
      $region30: #{tpu_custom_call.1} parent=5 // pred_check_branch
        %223 = sbr.rel (%p220) target = $region32
      $region31: #{tpu_custom_call.1} parent=5 // pred_region
        %s224 = ssub.s32 %s16, 1
        %s225 = sand.u32 %s59, 1
        %s226 = scalar_lea.sflag [#allocation4], %s225
        %s227 = sand.u32 %s59, 1
        %s228 = smul.addr %s227, 8
        %s229 = scalar_lea.vmem [#allocation3], %s228
        // Predicated region
        $region33: #{tpu_custom_call.1} parent=31 // pred_check
          %p230 = pneg %p72
        $region34: #{tpu_custom_call.1} parent=31 // pred_check_branch
          %232 = sbr.rel (%p230) target = $region36
        $region35: #{tpu_custom_call.1} parent=31 // pred_region
          %233 = dma.done %s226, 128
        $region36: #{tpu_custom_call.1} parent=31 // pred_fallthru
          _
        // Predicated region
        $region37: #{tpu_custom_call.1} parent=31 // pred_check
          %p234 = pneg %p100
        $region38: #{tpu_custom_call.1} parent=31 // pred_check_branch
          %236 = sbr.rel (%p234) target = $region40
        $region39: #{tpu_custom_call.1} parent=31 // pred_region
          %237 = dma.done [#allocation7], 1536
        $region40: #{tpu_custom_call.1} parent=31 // pred_fallthru
          _
        %s238 = sand.u32 %s59, 1
        %s239 = scalar_lea.sflag [#allocation4], %s238
        %s240 = sand.u32 %s59, 1
        %s241 = smul.addr %s240, 8
        %s242 = scalar_lea.vmem [#allocation3], %s241
        %p243 = pneg %p72
        %p244 = pneg %p69
        %p245 = pneg %p100
        %p246 = pneg %p97
        %p247 = scmp.lt.s32.totalorder %s29, 0
        %s248 = scalar_select %p247, %s29, 0
        %s249 = scalar_lea.vmem %s2, %s248
        %p250 = pneg %p126
        %p251 = pneg %p123
        %p252 = pneg %p156
        %p253 = pneg %p153
        %s254 = sand.u32 %s143, 1
        %s255 = scalar_lea.sflag [#allocation5], %s254
        %s256 = sand.u32 %s143, 1
        %s257 = smul.addr %s256, 24
        %s258 = scalar_lea.vmem [#allocation8], %s257
        %s259 = smul.u32 4, %s30
        %p260 = scmp.lt.s32.totalorder %s29, 0
        %s261 = scalar_select %p260, %s29, 0
        %s262 = scalar_lea.vmem %s2, %s261
        %p263 = scmp.eq.s32.totalorder %s30, 0
        // Predicated region
        $region41: #{tpu_custom_call.1} parent=31 // pred_check
          %p264 = pneg %p263
        $region42: #{tpu_custom_call.1} parent=31 // pred_check_branch
          %266 = sbr.rel (%p264) target = $region44
        $region43: #{tpu_custom_call.1} parent=31 // pred_region
          %vm267 = vcmask 261120
          %268 = vst.msk [vmem:[#allocation2] sm:$0xff] %vm267, 0.0
          %269 = vst.msk [vmem:[#allocation2 + $0x8] sm:$0xff] %vm267, 0.0
          %270 = vst.msk [vmem:[#allocation2 + $0x10] sm:$0xff] %vm267, 0.0
        $region44: #{tpu_custom_call.1} parent=31 // pred_fallthru
          _
        %v271 = vld [vmem:[%s229] sm:$0xff]
        %v272 = vld [vmem:[#allocation2] sm:$0xff]
        %v273 = vld [vmem:[#allocation6] sm:$0xff]
        %v274 = vld [vmem:[#allocation6 + $0x8] sm:$0xff]
        %v275 = vld [vmem:[#allocation6 + $0x10] sm:$0xff]
        %v276 = vld [vmem:[#allocation6 + $0x18] sm:$0xff]
        %vm277 = vcmask 261120
        %v279 = vsel %vm277, %v271, 0
        %281 = vmatprep.subr.mxu0 0.0
        %282 = vmatpush1.msra.mxu0 %v273
        %283 = vmatprep.subr.mxu0 0.0
        %284 = vmatpush1.msra.mxu0 %v274
        %285 = vmatprep.subr.mxu0 0.0
        %286 = vmatpush1.msra.mxu0 %v275
        %287 = vmatprep.subr.mxu0 0.0
        %288 = vmatpush1.msra.mxu0 %v276
        %289 = vmatprep.subr.mxu0 0.0
        %290 = vmatpush1.msra.mxu0 0.0
        %291 = vmatprep.subr.mxu0 0.0
        %292 = vmatpush1.msra.mxu0 0.0
        %293 = vmatprep.subr.mxu0 0.0
        %294 = vmatpush1.msra.mxu0 0.0
        %295 = vmatprep.subr.mxu0 0.0
        %296 = vmatpush1.msra.mxu0 0.0
        %297 = vmatprep.subr.mxu0 0.0
        %298 = vmatpush1.msra.mxu0 0.0
        %299 = vmatprep.subr.mxu0 0.0
        %300 = vmatpush1.msra.mxu0 0.0
        %301 = vmatprep.subr.mxu0 0.0
        %302 = vmatpush1.msra.mxu0 0.0
        %303 = vmatprep.subr.mxu0 0.0
        %304 = vmatpush1.msra.mxu0 0.0
        %305 = vmatprep.subr.mxu0 0.0
        %306 = vmatpush1.msra.mxu0 0.0
        %307 = vmatprep.subr.mxu0 0.0
        %308 = vmatpush1.msra.mxu0 0.0
        %309 = vmatprep.subr.mxu0 0.0
        %310 = vmatpush1.msra.mxu0 0.0
        %311 = vmatprep.subr.mxu0 0.0
        %312 = vmatpush1.msra.mxu0 0.0
        %313 = vmatprep.subr.mxu0 0.0
        %314 = vmatpush1.msra.mxu0 0.0
        %315 = vmatprep.subr.mxu0 0.0
        %316 = vmatpush1.msra.mxu0 0.0
        %317 = vmatprep.subr.mxu0 0.0
        %318 = vmatpush1.msra.mxu0 0.0
        %319 = vmatprep.subr.mxu0 0.0
        %320 = vmatpush1.msra.mxu0 0.0
        %321 = vmatprep.subr.mxu0 0.0
        %322 = vmatpush1.msra.mxu0 0.0
        %323 = vmatprep.subr.mxu0 0.0
        %324 = vmatpush1.msra.mxu0 0.0
        %325 = vmatprep.subr.mxu0 0.0
        %326 = vmatpush1.msra.mxu0 0.0
        %327 = vmatprep.subr.mxu0 0.0
        %328 = vmatpush1.msra.mxu0 0.0
        %329 = vmatprep.subr.mxu0 0.0
        %330 = vmatpush1.msra.mxu0 0.0
        %331 = vmatprep.subr.mxu0 0.0
        %332 = vmatpush1.msra.mxu0 0.0
        %333 = vmatprep.subr.mxu0 0.0
        %334 = vmatpush1.msra.mxu0 0.0
        %335 = vmatprep.subr.mxu0 0.0
        %336 = vmatpush1.msra.mxu0 0.0
        %337 = vmatprep.subr.mxu0 0.0
        %338 = vmatpush1.msra.mxu0 0.0
        %339 = vmatprep.subr.mxu0 0.0
        %340 = vmatpush1.msra.mxu0 0.0
        %341 = vmatprep.subr.mxu0 0.0
        %342 = vmatpush1.msra.mxu0 0.0
        %343 = vmatprep.subr.mxu0 0.0
        %344 = vmatpush1.msra.mxu0 0.0
        %345 = vmatprep.mubr.f32.mxu0 0.0
        %346 = vmatmul.mubr.f32.gmra.mrb[0].mxu0 %v279
        %v347 = vpop.f32.mrb[0].mxu0
        %v348 = vadd.f32 0.0, %v347
        %v349 = vpop.f32.mrb[0].mxu0
        %350 = vdwg.mxu0
        %v351 = vadd.f32 %v272, %v348
        %352 = vst.msk [vmem:[#allocation2] sm:$0xff] %vm277, %v351
        %s353 = scalar_lea.vmem [#allocation2], 8
        %v354 = vld [vmem:[%s353] sm:$0xff]
        %s355 = scalar_lea.vmem [#allocation6], 32
        %v356 = vld [vmem:[%s355] sm:$0xff]
        %v357 = vld [vmem:[%s355 + $0x8] sm:$0xff]
        %v358 = vld [vmem:[%s355 + $0x10] sm:$0xff]
        %v359 = vld [vmem:[%s355 + $0x18] sm:$0xff]
        %360 = vmatprep.subr.mxu0 0.0
        %361 = vmatpush1.msra.mxu0 %v356
        %362 = vmatprep.subr.mxu0 0.0
        %363 = vmatpush1.msra.mxu0 %v357
        %364 = vmatprep.subr.mxu0 0.0
        %365 = vmatpush1.msra.mxu0 %v358
        %366 = vmatprep.subr.mxu0 0.0
        %367 = vmatpush1.msra.mxu0 %v359
        %368 = vmatprep.subr.mxu0 0.0
        %369 = vmatpush1.msra.mxu0 0.0
        %370 = vmatprep.subr.mxu0 0.0
        %371 = vmatpush1.msra.mxu0 0.0
        %372 = vmatprep.subr.mxu0 0.0
        %373 = vmatpush1.msra.mxu0 0.0
        %374 = vmatprep.subr.mxu0 0.0
        %375 = vmatpush1.msra.mxu0 0.0
        %376 = vmatprep.subr.mxu0 0.0
        %377 = vmatpush1.msra.mxu0 0.0
        %378 = vmatprep.subr.mxu0 0.0
        %379 = vmatpush1.msra.mxu0 0.0
        %380 = vmatprep.subr.mxu0 0.0
        %381 = vmatpush1.msra.mxu0 0.0
        %382 = vmatprep.subr.mxu0 0.0
        %383 = vmatpush1.msra.mxu0 0.0
        %384 = vmatprep.subr.mxu0 0.0
        %385 = vmatpush1.msra.mxu0 0.0
        %386 = vmatprep.subr.mxu0 0.0
        %387 = vmatpush1.msra.mxu0 0.0
        %388 = vmatprep.subr.mxu0 0.0
        %389 = vmatpush1.msra.mxu0 0.0
        %390 = vmatprep.subr.mxu0 0.0
        %391 = vmatpush1.msra.mxu0 0.0
        %392 = vmatprep.subr.mxu0 0.0
        %393 = vmatpush1.msra.mxu0 0.0
        %394 = vmatprep.subr.mxu0 0.0
        %395 = vmatpush1.msra.mxu0 0.0
        %396 = vmatprep.subr.mxu0 0.0
        %397 = vmatpush1.msra.mxu0 0.0
        %398 = vmatprep.subr.mxu0 0.0
        %399 = vmatpush1.msra.mxu0 0.0
        %400 = vmatprep.subr.mxu0 0.0
        %401 = vmatpush1.msra.mxu0 0.0
        %402 = vmatprep.subr.mxu0 0.0
        %403 = vmatpush1.msra.mxu0 0.0
        %404 = vmatprep.subr.mxu0 0.0
        %405 = vmatpush1.msra.mxu0 0.0
        %406 = vmatprep.subr.mxu0 0.0
        %407 = vmatpush1.msra.mxu0 0.0
        %408 = vmatprep.subr.mxu0 0.0
        %409 = vmatpush1.msra.mxu0 0.0
        %410 = vmatprep.subr.mxu0 0.0
        %411 = vmatpush1.msra.mxu0 0.0
        %412 = vmatprep.subr.mxu0 0.0
        %413 = vmatpush1.msra.mxu0 0.0
        %414 = vmatprep.subr.mxu0 0.0
        %415 = vmatpush1.msra.mxu0 0.0
        %416 = vmatprep.subr.mxu0 0.0
        %417 = vmatpush1.msra.mxu0 0.0
        %418 = vmatprep.subr.mxu0 0.0
        %419 = vmatpush1.msra.mxu0 0.0
        %420 = vmatprep.subr.mxu0 0.0
        %421 = vmatpush1.msra.mxu0 0.0
        %422 = vmatprep.subr.mxu0 0.0
        %423 = vmatpush1.msra.mxu0 0.0
        %424 = vmatprep.mubr.f32.mxu0 0.0
        %425 = vmatmul.mubr.f32.gmra.mrb[0].mxu0 %v279
        %v426 = vpop.f32.mrb[0].mxu0
        %v427 = vadd.f32 0.0, %v426
        %v428 = vpop.f32.mrb[0].mxu0
        %429 = vdwg.mxu0
        %v430 = vadd.f32 %v354, %v427
        %431 = vst.msk [vmem:[%s353] sm:$0xff] %vm277, %v430
        %s432 = scalar_lea.vmem [#allocation2], 16
        %v433 = vld [vmem:[%s432] sm:$0xff]
        %s434 = scalar_lea.vmem [#allocation6], 64
        %v435 = vld [vmem:[%s434] sm:$0xff]
        %v436 = vld [vmem:[%s434 + $0x8] sm:$0xff]
        %v437 = vld [vmem:[%s434 + $0x10] sm:$0xff]
        %v438 = vld [vmem:[%s434 + $0x18] sm:$0xff]
        %439 = vmatprep.subr.mxu0 0.0
        %440 = vmatpush1.msra.mxu0 %v435
        %441 = vmatprep.subr.mxu0 0.0
        %442 = vmatpush1.msra.mxu0 %v436
        %443 = vmatprep.subr.mxu0 0.0
        %444 = vmatpush1.msra.mxu0 %v437
        %445 = vmatprep.subr.mxu0 0.0
        %446 = vmatpush1.msra.mxu0 %v438
        %447 = vmatprep.subr.mxu0 0.0
        %448 = vmatpush1.msra.mxu0 0.0
        %449 = vmatprep.subr.mxu0 0.0
        %450 = vmatpush1.msra.mxu0 0.0
        %451 = vmatprep.subr.mxu0 0.0
        %452 = vmatpush1.msra.mxu0 0.0
        %453 = vmatprep.subr.mxu0 0.0
        %454 = vmatpush1.msra.mxu0 0.0
        %455 = vmatprep.subr.mxu0 0.0
        %456 = vmatpush1.msra.mxu0 0.0
        %457 = vmatprep.subr.mxu0 0.0
        %458 = vmatpush1.msra.mxu0 0.0
        %459 = vmatprep.subr.mxu0 0.0
        %460 = vmatpush1.msra.mxu0 0.0
        %461 = vmatprep.subr.mxu0 0.0
        %462 = vmatpush1.msra.mxu0 0.0
        %463 = vmatprep.subr.mxu0 0.0
        %464 = vmatpush1.msra.mxu0 0.0
        %465 = vmatprep.subr.mxu0 0.0
        %466 = vmatpush1.msra.mxu0 0.0
        %467 = vmatprep.subr.mxu0 0.0
        %468 = vmatpush1.msra.mxu0 0.0
        %469 = vmatprep.subr.mxu0 0.0
        %470 = vmatpush1.msra.mxu0 0.0
        %471 = vmatprep.subr.mxu0 0.0
        %472 = vmatpush1.msra.mxu0 0.0
        %473 = vmatprep.subr.mxu0 0.0
        %474 = vmatpush1.msra.mxu0 0.0
        %475 = vmatprep.subr.mxu0 0.0
        %476 = vmatpush1.msra.mxu0 0.0
        %477 = vmatprep.subr.mxu0 0.0
        %478 = vmatpush1.msra.mxu0 0.0
        %479 = vmatprep.subr.mxu0 0.0
        %480 = vmatpush1.msra.mxu0 0.0
        %481 = vmatprep.subr.mxu0 0.0
        %482 = vmatpush1.msra.mxu0 0.0
        %483 = vmatprep.subr.mxu0 0.0
        %484 = vmatpush1.msra.mxu0 0.0
        %485 = vmatprep.subr.mxu0 0.0
        %486 = vmatpush1.msra.mxu0 0.0
        %487 = vmatprep.subr.mxu0 0.0
        %488 = vmatpush1.msra.mxu0 0.0
        %489 = vmatprep.subr.mxu0 0.0
        %490 = vmatpush1.msra.mxu0 0.0
        %491 = vmatprep.subr.mxu0 0.0
        %492 = vmatpush1.msra.mxu0 0.0
        %493 = vmatprep.subr.mxu0 0.0
        %494 = vmatpush1.msra.mxu0 0.0
        %495 = vmatprep.subr.mxu0 0.0
        %496 = vmatpush1.msra.mxu0 0.0
        %497 = vmatprep.subr.mxu0 0.0
        %498 = vmatpush1.msra.mxu0 0.0
        %499 = vmatprep.subr.mxu0 0.0
        %500 = vmatpush1.msra.mxu0 0.0
        %501 = vmatprep.subr.mxu0 0.0
        %502 = vmatpush1.msra.mxu0 0.0
        %503 = vmatprep.mubr.f32.mxu0 0.0
        %504 = vmatmul.mubr.f32.gmra.mrb[0].mxu0 %v279
        %v505 = vpop.f32.mrb[0].mxu0
        %v506 = vadd.f32 0.0, %v505
        %v507 = vpop.f32.mrb[0].mxu0
        %508 = vdwg.mxu0
        %v509 = vadd.f32 %v433, %v506
        %510 = vst.msk [vmem:[%s432] sm:$0xff] %vm277, %v509
        // Predicated region
        $region45: #{tpu_custom_call.1} parent=31 // pred_check
          %p511 = pneg %p263
        $region46: #{tpu_custom_call.1} parent=31 // pred_check_branch
          %513 = sbr.rel (%p511) target = $region48
        $region47: #{tpu_custom_call.1} parent=31 // pred_region
          %v514 = vld [vmem:[#allocation2] sm:$0xff]
          %v515 = vld [vmem:[#allocation2 + $0x8] sm:$0xff]
          %v516 = vld [vmem:[#allocation2 + $0x10] sm:$0xff]
          %v517 = vld [vmem:[%s262] sm:$0x1]
          %v518 = vld [vmem:[%s262 + $0x1] sm:$0x1]
          %v519 = vld [vmem:[%s262 + $0x2] sm:$0x1]
          %v523 = vlaneseq
          %v524 = vshrl.u32 %v523, 7
          %v525 = vsub.s32 0, %v524
          %v526 = vrot.slane %v517, %v525
          %v527 = vlaneseq
          %v528 = vshrl.u32 %v527, 7
          %v529 = vsub.s32 0, %v528
          %v530 = vrot.slane %v518, %v529
          %v531 = vlaneseq
          %v532 = vshrl.u32 %v531, 7
          %v533 = vsub.s32 0, %v532
          %v534 = vrot.slane %v519, %v533
          %v538 = vadd.f32 %v514, %v526
          %v539 = vadd.f32 %v515, %v530
          %v540 = vadd.f32 %v516, %v534
          %541 = vst.msk [vmem:[%s258] sm:$0xff] %vm277, %v538
          %542 = vst.msk [vmem:[%s258 + $0x8] sm:$0xff] %vm277, %v539
          %543 = vst.msk [vmem:[%s258 + $0x10] sm:$0xff] %vm277, %v540
        $region48: #{tpu_custom_call.1} parent=31 // pred_fallthru
          _
        %s544 = sand.u32 %s143, 1
        %s545 = scalar_lea.sflag [#allocation5], %s544
        %s546 = sand.u32 %s143, 1
        %s547 = smul.addr %s546, 24
        %s548 = scalar_lea.vmem [#allocation8], %s547
        // Predicated region
        $region49: #{tpu_custom_call.1} parent=31 // pred_check
          %p549 = pneg %p153
        $region50: #{tpu_custom_call.1} parent=31 // pred_check_branch
          %551 = sbr.rel (%p549) target = $region52
        $region51: #{tpu_custom_call.1} parent=31 // pred_region
          %s553 = ssub.s32 384, 384
          %554 = vsyncadd %s545, %s553
          %s555 = sadd.s32 %s29, %s28
          %s556 = sadd.s32 %s555, %s27
          %s557 = smul.addr %s556, 128
          %s558 = scalar_lea.hbm %s3, %s557
          %s559 = sshll.u32 %s548, 4
          %s560 = int_to_ptr.vmem [resolvable:$true] %s559
          %565 = dma.vmem_to_hbm [thread:$0]  %s560, 384, %s558, %s545, 128, 256, 8
        $region52: #{tpu_custom_call.1} parent=31 // pred_fallthru
          _
      $region32: #{tpu_custom_call.1} parent=5 // pred_fallthru
        _
      %p566 = scmp.le.s32.totalorder 2, %s16
      // Predicated region
      $region53: #{tpu_custom_call.1} parent=5 // pred_check
        %p567 = pneg %p566
      $region54: #{tpu_custom_call.1} parent=5 // pred_check_branch
        %569 = sbr.rel (%p567) target = $region56
      $region55: #{tpu_custom_call.1} parent=5 // pred_region
        %s570 = ssub.s32 %s16, 2
        // Predicated region
        $region57: #{tpu_custom_call.1} parent=55 // pred_check
          %p571 = pneg %p159
        $region58: #{tpu_custom_call.1} parent=55 // pred_check_branch
          %573 = sbr.rel (%p571) target = $region60
        $region59: #{tpu_custom_call.1} parent=55 // pred_region
          %s574 = sand.u32 %s144, 1
          %s575 = scalar_lea.sflag [#allocation5], %s574
          %s576 = sand.u32 %s144, 1
          %s577 = smul.addr %s576, 24
          %s578 = scalar_lea.vmem [#allocation8], %s577
          %579 = dma.done %s575, 384
        $region60: #{tpu_custom_call.1} parent=55 // pred_fallthru
          _
      $region56: #{tpu_custom_call.1} parent=5 // pred_fallthru
        _
    $region6: #{tpu_custom_call.1} parent=1 // loop_footer
      %s20 = sadd.s32 1, %s16
    $region7: #{tpu_custom_call.1} parent=1 // loop_footer_branch
      %15 = sbr.rel target = $region3
    $region8: #{tpu_custom_call.1} parent=1 // loop_exit
      _
    %580 = vsyncpa [#allocation4], 1
    %s581 = scalar_lea.sflag [#allocation4], 1
    %582 = vsyncpa %s581, 1
    %583 = vsyncpa [#allocation7], 1
    %584 = vsyncpa [#allocation5], 1
    %s585 = scalar_lea.sflag [#allocation5], 1
    %586 = vsyncpa %s585, 1

</llo_original>
